<compile_context>
chip_gen: v7x
topology: tpu7x:2x2x1
jax: 0.10.0
libtpu: 0.0.40
codegen_flags: <defaults>
</compile_context>

<pallas_src>
import jax
import jax.numpy as jnp
from jax.experimental import pallas as pl
from jax.experimental.pallas import tpu as pltpu


def _lstm_decoder_kernel(bout_ref,          # SMEM (1,) f32
                         gx_ref,            # VMEM (S, B, 4H) f32 : x@W_ih + b
                         hc0_ref,           # VMEM (2, B, H)  f32 : stacked h0, c0
                         whh_ref,           # VMEM (H, 4H)    bf16: fused recurrent weight
                         wout_ref,          # VMEM (1, 1, H)  f32 : output projection weight
                         mask_ref,          # VMEM (S, B, H)  f32 : pre-scaled dropout keep-mask
                         out_ref,           # VMEM (S, B)     f32
                         hn_ref, cn_ref,    # VMEM (B, H)     f32
                         hs_sc):            # VMEM scratch (S, B, H) f32
    S, B, G = gx_ref.shape                  # G == 4*H
    H = hn_ref.shape[-1]

    # Loop-invariant: fused recurrent weight (bf16) and the lane mask that
    # selects the cell-gate (g) lanes of the fused gate vector.
    whh = whh_ref[...]                                          # (H, 4H) bf16
    lane = jax.lax.broadcasted_iota(jnp.int32, (B, G), 1)
    is_g = (lane >= 2 * H) & (lane < 3 * H)

    def step(t, carry):
        h, c = carry
        # Single fused recurrent matmul on the MXU (bf16 in, f32 accumulate).
        z = gx_ref[t] + jnp.dot(h.astype(jnp.bfloat16), whh,
                                preferred_element_type=jnp.float32)   # (B, 4H)
        # One EUP dispatch for all four gates:
        #   sigmoid(x) = 0.5 * (1 + tanh(x / 2)) on i/f/o lanes, tanh(x) on g.
        th = jnp.tanh(jnp.where(is_g, z, 0.5 * z))
        a = jnp.where(is_g, th, 0.5 * (th + 1.0))
        # PyTorch gate ordering along 4H: input, forget, cell(g), output.
        i_g = a[:, 0 * H:1 * H]
        f_g = a[:, 1 * H:2 * H]
        g_g = a[:, 2 * H:3 * H]
        o_g = a[:, 3 * H:4 * H]

        c_new = f_g * c + i_g * g_g
        h_new = o_g * jnp.tanh(c_new)
        hs_sc[t] = h_new
        return (h_new, c_new)

    h_f, c_f = jax.lax.fori_loop(0, S, step, (hc0_ref[0], hc0_ref[1]),
                                 unroll=True)
    hn_ref[...] = h_f
    cn_ref[...] = c_f

    # Fused epilogue: inverted dropout + Linear(H, 1) over the whole sequence.
    y = hs_sc[...] * mask_ref[...]                                    # (S,B,H)
    out_ref[...] = jnp.sum(y * wout_ref[...], axis=-1) + bout_ref[0]  # (S,B)


def lstm_decoder_forward(x, hidden, params, *, p_drop, rng_key=None):
    """x: (B, S, F) float32 (batch_first); hidden = (h0, c0), each (1, B, H)."""
    h0, c0 = hidden
    B, S, F = x.shape
    H = h0.shape[-1]

    w_ih = params["w_ih"].astype(jnp.float32)                   # (4H, F)
    w_hh = params["w_hh"].astype(jnp.float32)                   # (4H, H)
    b = (params["b_ih"] + params["b_hh"]).astype(jnp.float32)   # (4H,)

    # Input projection for all timesteps (one batched XLA matmul, bias folded
    # in), time-major and lane-dense: (S, B, 4H).
    gx = jnp.einsum("bsf,gf->sbg", x.astype(jnp.float32), w_ih) + b

    # Fused recurrent weight, bf16 for the MXU (f32 accumulation in-kernel).
    whh = w_hh.T.astype(jnp.bfloat16)                           # (H, 4H)

    w_out = params["w_out"].reshape(1, 1, H).astype(jnp.float32)
    b_out = params["b_out"].reshape(1).astype(jnp.float32)

    hc0 = jnp.stack([h0.reshape(B, H), c0.reshape(B, H)]).astype(jnp.float32)

    # Inverted dropout mask (F.dropout with training=True: always applied).
    # TODO(synk): PyTorch's dropout RNG stream is not reproducible in JAX; the
    # mask is drawn with jax.random in the wrapper (same keep-prob / scaling).
    p = float(p_drop)
    if not 0.0 <= p <= 1.0:
        raise ValueError(f"dropout probability must be in [0, 1], got {p}")
    if p == 1.0:
        mask = jnp.zeros((S, B, H), jnp.float32)
    elif p > 0.0:
        if rng_key is None:
            rng_key = jax.random.PRNGKey(0)
        keep = jax.random.bernoulli(rng_key, 1.0 - p, (S, B, H))
        mask = keep.astype(jnp.float32) / (1.0 - p)
    else:
        mask = jnp.ones((S, B, H), jnp.float32)

    vmem = pl.BlockSpec(memory_space=pltpu.MemorySpace.VMEM)
    smem = pl.BlockSpec(memory_space=pltpu.MemorySpace.SMEM)

    out_sb, h_n, c_n = pl.pallas_call(
        _lstm_decoder_kernel,
        out_shape=(
            jax.ShapeDtypeStruct((S, B), jnp.float32),
            jax.ShapeDtypeStruct((B, H), jnp.float32),
            jax.ShapeDtypeStruct((B, H), jnp.float32),
        ),
        in_specs=[smem] + [vmem] * 5,
        out_specs=(vmem, vmem, vmem),
        scratch_shapes=[pltpu.VMEM((S, B, H), jnp.float32)],
    )(b_out, gx, hc0, whh, w_out, mask)

    # (S, B) -> (B, S, 1).  At these shapes the transpose is a negligible XLA
    # op; fold into the kernel store only if B/S ever grow.
    out = jnp.transpose(out_sb)[:, :, None]
    return out, (h_n.reshape(1, B, H), c_n.reshape(1, B, H))


def ref_lstm_decoder(x, hidden, params):
    """Pure-JAX f32 reference (dropout disabled) for correctness checking."""
    h0, c0 = hidden
    B, S, F = x.shape
    H = h0.shape[-1]
    w_ih, w_hh = params["w_ih"], params["w_hh"]
    b_ih, b_hh = params["b_ih"], params["b_hh"]

    def step(carry, x_t):
        h, c = carry
        gates = x_t @ w_ih.T + b_ih + h @ w_hh.T + b_hh
        i_g = jax.nn.sigmoid(gates[:, 0:H])
        f_g = jax.nn.sigmoid(gates[:, H:2 * H])
        g_g = jnp.tanh(gates[:, 2 * H:3 * H])
        o_g = jax.nn.sigmoid(gates[:, 3 * H:4 * H])
        c_new = f_g * c + i_g * g_g
        h_new = o_g * jnp.tanh(c_new)
        return (h_new, c_new), h_new

    x_tm = jnp.transpose(x, (1, 0, 2))
    (h_n, c_n), hs = jax.lax.scan(step, (h0.reshape(B, H), c0.reshape(B, H)), x_tm)
    out = hs @ params["w_out"].T + params["b_out"]       # (S, B, 1)
    return jnp.transpose(out, (1, 0, 2)), (h_n.reshape(1, B, H), c_n.reshape(1, B, H))


if __name__ == "__main__":
    # Config implied by the module: n_features -> F, args.lstm_dim == args.linear_dim == H.
    B, S, F, H = 2, 8, 8, 32
    P_DROP = 0.1          # args.dec_out_droprate

    key = jax.random.PRNGKey(0)
    ks = jax.random.split(key, 9)
    k_init = 1.0 / jnp.sqrt(H)
    u = lambda k, shape: jax.random.uniform(k, shape, jnp.float32, -k_init, k_init)

    params = {
        "w_ih": u(ks[0], (4 * H, F)),   # nn.LSTM weight_ih_l0
        "w_hh": u(ks[1], (4 * H, H)),   # nn.LSTM weight_hh_l0
        "b_ih": u(ks[2], (4 * H,)),
        "b_hh": u(ks[3], (4 * H,)),
        "w_out": u(ks[4], (1, H)),      # nn.Linear(linear_dim, 1)
        "b_out": u(ks[5], (1,)),
    }

    x = jax.random.normal(ks[6], (B, S, F), jnp.float32)
    h0 = jax.random.normal(ks[7], (1, B, H), jnp.float32)
    c0 = jax.random.normal(ks[8], (1, B, H), jnp.float32)

    # Correctness check with dropout disabled.  Tolerance loosened (bf16
    # recurrent matmul operands, f32 accumulation & elementwise state).
    out0, (hn0, cn0) = lstm_decoder_forward(x, (h0, c0), params, p_drop=0.0)
    ref_out, (ref_hn, ref_cn) = ref_lstm_decoder(x, (h0, c0), params)
    jax.block_until_ready((out0, hn0, cn0))
    assert jnp.allclose(out0, ref_out, atol=2e-2, rtol=2e-2)
    assert jnp.allclose(hn0, ref_hn, atol=2e-2, rtol=2e-2)
    assert jnp.allclose(cn0, ref_cn, atol=2e-2, rtol=2e-2)

    # Actual module semantics: dropout always active (training=True).
    out, (h_n, c_n) = lstm_decoder_forward(
        x, (h0, c0), params, p_drop=P_DROP, rng_key=jax.random.PRNGKey(1234))
    jax.block_until_ready((out, h_n, c_n))
    assert out.shape == (B, S, 1) and h_n.shape == (1, B, H) and c_n.shape == (1, B, H)

    print("KERNEL_OK")
</pallas_src>

<mosaic_0001>
module attributes {stable_mosaic.version = 11 : i64} {
  func.func @_lstm_decoder_kernel(%arg0: memref<1xf32, #tpu.memory_space<smem>>, %arg1: memref<8x2x128xf32, #tpu.memory_space<vmem>>, %arg2: memref<2x2x32xf32, #tpu.memory_space<vmem>>, %arg3: memref<32x128xbf16, #tpu.memory_space<vmem>>, %arg4: memref<1x1x32xf32, #tpu.memory_space<vmem>>, %arg5: memref<8x2x32xf32, #tpu.memory_space<vmem>>, %arg6: memref<8x2xf32, #tpu.memory_space<vmem>>, %arg7: memref<2x32xf32, #tpu.memory_space<vmem>>, %arg8: memref<2x32xf32, #tpu.memory_space<vmem>>, %arg9: memref<8x2x32xf32, #tpu.memory_space<vmem>>) attributes {dimension_semantics = [], scalar_prefetch = 0 : i64, scratch_operands = 1 : i64, tpu.core_type = #tpu.core_type<tc>} {
    %c0 = arith.constant 0 : index
    %c0_0 = arith.constant 0 : index
    %0 = vector.load %arg3[%c0, %c0_0] : memref<32x128xbf16, #tpu.memory_space<vmem>>, vector<32x128xbf16>
    %1 = tpu.iota {dimensions = array<i32: 1>} : vector<2x128xi32>
    %c64_i32 = arith.constant 64 : i32
    %2 = vector.broadcast %c64_i32 : i32 to vector<2x128xi32>
    %3 = arith.cmpi sge, %1, %2 : vector<2x128xi32>
    %c96_i32 = arith.constant 96 : i32
    %4 = vector.broadcast %c96_i32 : i32 to vector<2x128xi32>
    %5 = arith.cmpi slt, %1, %4 : vector<2x128xi32>
    %6 = arith.andi %3, %5 : vector<2x128xi1>
    %c0_1 = arith.constant 0 : index
    %c0_2 = arith.constant 0 : index
    %c0_3 = arith.constant 0 : index
    %7 = vector.load %arg2[%c0_1, %c0_2, %c0_3] : memref<2x2x32xf32, #tpu.memory_space<vmem>>, vector<1x2x32xf32>
    %8 = vector.shape_cast %7 : vector<1x2x32xf32> to vector<2x32xf32>
    %c1 = arith.constant 1 : index
    %c0_4 = arith.constant 0 : index
    %c0_5 = arith.constant 0 : index
    %9 = vector.load %arg2[%c1, %c0_4, %c0_5] : memref<2x2x32xf32, #tpu.memory_space<vmem>>, vector<1x2x32xf32>
    %10 = vector.shape_cast %9 : vector<1x2x32xf32> to vector<2x32xf32>
    %c0_i32 = arith.constant 0 : i32
    %11 = arith.index_cast %c0_i32 : i32 to index
    %c0_6 = arith.constant 0 : index
    %c0_7 = arith.constant 0 : index
    %12 = vector.load %arg1[%11, %c0_6, %c0_7] : memref<8x2x128xf32, #tpu.memory_space<vmem>>, vector<1x2x128xf32>
    %13 = vector.shape_cast %12 : vector<1x2x128xf32> to vector<2x128xf32>
    %14 = arith.truncf %8 : vector<2x32xf32> to vector<2x32xbf16>
    %cst = arith.constant dense<0.000000e+00> : vector<2x128xf32>
    %15 = tpu.matmul %14, %0, %cst {dimension_numbers = #tpu.dot_dimension_numbers<[1], [0], [0], [1], [0, 0, 1, 1], [], []>} : vector<2x32xbf16>, vector<32x128xbf16>, vector<2x128xf32> -> vector<2x128xf32>
    %16 = arith.addf %13, %15 : vector<2x128xf32>
    %cst_8 = arith.constant 5.000000e-01 : f32
    %17 = vector.broadcast %cst_8 : f32 to vector<2x128xf32>
    %18 = arith.mulf %17, %16 : vector<2x128xf32>
    %19 = arith.select %6, %16, %18 : vector<2x128xi1>, vector<2x128xf32>
    %20 = math.tanh %19 : vector<2x128xf32>
    %cst_9 = arith.constant 1.000000e+00 : f32
    %21 = vector.broadcast %cst_9 : f32 to vector<2x128xf32>
    %22 = arith.addf %20, %21 : vector<2x128xf32>
    %cst_10 = arith.constant 5.000000e-01 : f32
    %23 = vector.broadcast %cst_10 : f32 to vector<2x128xf32>
    %24 = arith.mulf %23, %22 : vector<2x128xf32>
    %25 = arith.select %6, %20, %24 : vector<2x128xi1>, vector<2x128xf32>
    %26 = vector.extract_strided_slice %25 {offsets = [0, 0], sizes = [2, 32], strides = [1, 1]} : vector<2x128xf32> to vector<2x32xf32>
    %27 = vector.extract_strided_slice %25 {offsets = [0, 32], sizes = [2, 32], strides = [1, 1]} : vector<2x128xf32> to vector<2x32xf32>
    %28 = vector.extract_strided_slice %25 {offsets = [0, 64], sizes = [2, 32], strides = [1, 1]} : vector<2x128xf32> to vector<2x32xf32>
    %29 = vector.extract_strided_slice %25 {offsets = [0, 96], sizes = [2, 32], strides = [1, 1]} : vector<2x128xf32> to vector<2x32xf32>
    %30 = arith.mulf %27, %10 : vector<2x32xf32>
    %31 = arith.mulf %26, %28 : vector<2x32xf32>
    %32 = arith.addf %30, %31 : vector<2x32xf32>
    %33 = math.tanh %32 : vector<2x32xf32>
    %34 = arith.mulf %29, %33 : vector<2x32xf32>
    %35 = arith.index_cast %c0_i32 : i32 to index
    %c0_11 = arith.constant 0 : index
    %c0_12 = arith.constant 0 : index
    %36 = vector.load %arg9[%35, %c0_11, %c0_12] : memref<8x2x32xf32, #tpu.memory_space<vmem>>, vector<1x2x32xf32>
    %37 = vector.shape_cast %36 : vector<1x2x32xf32> to vector<2x32xf32>
    %38 = vector.shape_cast %34 : vector<2x32xf32> to vector<1x2x32xf32>
    tpu.vector_store %arg9[%35, %c0_11, %c0_12], %38 {strides = array<i32>} : memref<8x2x32xf32, #tpu.memory_space<vmem>>, vector<1x2x32xf32>,
    %c1_i32 = arith.constant 1 : i32
    %39 = arith.index_cast %c1_i32 : i32 to index
    %c0_13 = arith.constant 0 : index
    %c0_14 = arith.constant 0 : index
    %40 = vector.load %arg1[%39, %c0_13, %c0_14] : memref<8x2x128xf32, #tpu.memory_space<vmem>>, vector<1x2x128xf32>
    %41 = vector.shape_cast %40 : vector<1x2x128xf32> to vector<2x128xf32>
    %42 = arith.truncf %34 : vector<2x32xf32> to vector<2x32xbf16>
    %cst_15 = arith.constant dense<0.000000e+00> : vector<2x128xf32>
    %43 = tpu.matmul %42, %0, %cst_15 {dimension_numbers = #tpu.dot_dimension_numbers<[1], [0], [0], [1], [0, 0, 1, 1], [], []>} : vector<2x32xbf16>, vector<32x128xbf16>, vector<2x128xf32> -> vector<2x128xf32>
    %44 = arith.addf %41, %43 : vector<2x128xf32>
    %cst_16 = arith.constant 5.000000e-01 : f32
    %45 = vector.broadcast %cst_16 : f32 to vector<2x128xf32>
    %46 = arith.mulf %45, %44 : vector<2x128xf32>
    %47 = arith.select %6, %44, %46 : vector<2x128xi1>, vector<2x128xf32>
    %48 = math.tanh %47 : vector<2x128xf32>
    %cst_17 = arith.constant 1.000000e+00 : f32
    %49 = vector.broadcast %cst_17 : f32 to vector<2x128xf32>
    %50 = arith.addf %48, %49 : vector<2x128xf32>
    %cst_18 = arith.constant 5.000000e-01 : f32
    %51 = vector.broadcast %cst_18 : f32 to vector<2x128xf32>
    %52 = arith.mulf %51, %50 : vector<2x128xf32>
    %53 = arith.select %6, %48, %52 : vector<2x128xi1>, vector<2x128xf32>
    %54 = vector.extract_strided_slice %53 {offsets = [0, 0], sizes = [2, 32], strides = [1, 1]} : vector<2x128xf32> to vector<2x32xf32>
    %55 = vector.extract_strided_slice %53 {offsets = [0, 32], sizes = [2, 32], strides = [1, 1]} : vector<2x128xf32> to vector<2x32xf32>
    %56 = vector.extract_strided_slice %53 {offsets = [0, 64], sizes = [2, 32], strides = [1, 1]} : vector<2x128xf32> to vector<2x32xf32>
    %57 = vector.extract_strided_slice %53 {offsets = [0, 96], sizes = [2, 32], strides = [1, 1]} : vector<2x128xf32> to vector<2x32xf32>
    %58 = arith.mulf %55, %32 : vector<2x32xf32>
    %59 = arith.mulf %54, %56 : vector<2x32xf32>
    %60 = arith.addf %58, %59 : vector<2x32xf32>
    %61 = math.tanh %60 : vector<2x32xf32>
    %62 = arith.mulf %57, %61 : vector<2x32xf32>
    %63 = arith.index_cast %c1_i32 : i32 to index
    %c0_19 = arith.constant 0 : index
    %c0_20 = arith.constant 0 : index
    %64 = vector.load %arg9[%63, %c0_19, %c0_20] : memref<8x2x32xf32, #tpu.memory_space<vmem>>, vector<1x2x32xf32>
    %65 = vector.shape_cast %64 : vector<1x2x32xf32> to vector<2x32xf32>
    %66 = vector.shape_cast %62 : vector<2x32xf32> to vector<1x2x32xf32>
    tpu.vector_store %arg9[%63, %c0_19, %c0_20], %66 {strides = array<i32>} : memref<8x2x32xf32, #tpu.memory_space<vmem>>, vector<1x2x32xf32>,
    %c2_i32 = arith.constant 2 : i32
    %67 = arith.index_cast %c2_i32 : i32 to index
    %c0_21 = arith.constant 0 : index
    %c0_22 = arith.constant 0 : index
    %68 = vector.load %arg1[%67, %c0_21, %c0_22] : memref<8x2x128xf32, #tpu.memory_space<vmem>>, vector<1x2x128xf32>
    %69 = vector.shape_cast %68 : vector<1x2x128xf32> to vector<2x128xf32>
    %70 = arith.truncf %62 : vector<2x32xf32> to vector<2x32xbf16>
    %cst_23 = arith.constant dense<0.000000e+00> : vector<2x128xf32>
    %71 = tpu.matmul %70, %0, %cst_23 {dimension_numbers = #tpu.dot_dimension_numbers<[1], [0], [0], [1], [0, 0, 1, 1], [], []>} : vector<2x32xbf16>, vector<32x128xbf16>, vector<2x128xf32> -> vector<2x128xf32>
    %72 = arith.addf %69, %71 : vector<2x128xf32>
    %cst_24 = arith.constant 5.000000e-01 : f32
    %73 = vector.broadcast %cst_24 : f32 to vector<2x128xf32>
    %74 = arith.mulf %73, %72 : vector<2x128xf32>
    %75 = arith.select %6, %72, %74 : vector<2x128xi1>, vector<2x128xf32>
    %76 = math.tanh %75 : vector<2x128xf32>
    %cst_25 = arith.constant 1.000000e+00 : f32
    %77 = vector.broadcast %cst_25 : f32 to vector<2x128xf32>
    %78 = arith.addf %76, %77 : vector<2x128xf32>
    %cst_26 = arith.constant 5.000000e-01 : f32
    %79 = vector.broadcast %cst_26 : f32 to vector<2x128xf32>
    %80 = arith.mulf %79, %78 : vector<2x128xf32>
    %81 = arith.select %6, %76, %80 : vector<2x128xi1>, vector<2x128xf32>
    %82 = vector.extract_strided_slice %81 {offsets = [0, 0], sizes = [2, 32], strides = [1, 1]} : vector<2x128xf32> to vector<2x32xf32>
    %83 = vector.extract_strided_slice %81 {offsets = [0, 32], sizes = [2, 32], strides = [1, 1]} : vector<2x128xf32> to vector<2x32xf32>
    %84 = vector.extract_strided_slice %81 {offsets = [0, 64], sizes = [2, 32], strides = [1, 1]} : vector<2x128xf32> to vector<2x32xf32>
    %85 = vector.extract_strided_slice %81 {offsets = [0, 96], sizes = [2, 32], strides = [1, 1]} : vector<2x128xf32> to vector<2x32xf32>
    %86 = arith.mulf %83, %60 : vector<2x32xf32>
    %87 = arith.mulf %82, %84 : vector<2x32xf32>
    %88 = arith.addf %86, %87 : vector<2x32xf32>
    %89 = math.tanh %88 : vector<2x32xf32>
    %90 = arith.mulf %85, %89 : vector<2x32xf32>
    %91 = arith.index_cast %c2_i32 : i32 to index
    %c0_27 = arith.constant 0 : index
    %c0_28 = arith.constant 0 : index
    %92 = vector.load %arg9[%91, %c0_27, %c0_28] : memref<8x2x32xf32, #tpu.memory_space<vmem>>, vector<1x2x32xf32>
    %93 = vector.shape_cast %92 : vector<1x2x32xf32> to vector<2x32xf32>
    %94 = vector.shape_cast %90 : vector<2x32xf32> to vector<1x2x32xf32>
    tpu.vector_store %arg9[%91, %c0_27, %c0_28], %94 {strides = array<i32>} : memref<8x2x32xf32, #tpu.memory_space<vmem>>, vector<1x2x32xf32>,
    %c3_i32 = arith.constant 3 : i32
    %95 = arith.index_cast %c3_i32 : i32 to index
    %c0_29 = arith.constant 0 : index
    %c0_30 = arith.constant 0 : index
    %96 = vector.load %arg1[%95, %c0_29, %c0_30] : memref<8x2x128xf32, #tpu.memory_space<vmem>>, vector<1x2x128xf32>
    %97 = vector.shape_cast %96 : vector<1x2x128xf32> to vector<2x128xf32>
    %98 = arith.truncf %90 : vector<2x32xf32> to vector<2x32xbf16>
    %cst_31 = arith.constant dense<0.000000e+00> : vector<2x128xf32>
    %99 = tpu.matmul %98, %0, %cst_31 {dimension_numbers = #tpu.dot_dimension_numbers<[1], [0], [0], [1], [0, 0, 1, 1], [], []>} : vector<2x32xbf16>, vector<32x128xbf16>, vector<2x128xf32> -> vector<2x128xf32>
    %100 = arith.addf %97, %99 : vector<2x128xf32>
    %cst_32 = arith.constant 5.000000e-01 : f32
    %101 = vector.broadcast %cst_32 : f32 to vector<2x128xf32>
    %102 = arith.mulf %101, %100 : vector<2x128xf32>
    %103 = arith.select %6, %100, %102 : vector<2x128xi1>, vector<2x128xf32>
    %104 = math.tanh %103 : vector<2x128xf32>
    %cst_33 = arith.constant 1.000000e+00 : f32
    %105 = vector.broadcast %cst_33 : f32 to vector<2x128xf32>
    %106 = arith.addf %104, %105 : vector<2x128xf32>
    %cst_34 = arith.constant 5.000000e-01 : f32
    %107 = vector.broadcast %cst_34 : f32 to vector<2x128xf32>
    %108 = arith.mulf %107, %106 : vector<2x128xf32>
    %109 = arith.select %6, %104, %108 : vector<2x128xi1>, vector<2x128xf32>
    %110 = vector.extract_strided_slice %109 {offsets = [0, 0], sizes = [2, 32], strides = [1, 1]} : vector<2x128xf32> to vector<2x32xf32>
    %111 = vector.extract_strided_slice %109 {offsets = [0, 32], sizes = [2, 32], strides = [1, 1]} : vector<2x128xf32> to vector<2x32xf32>
    %112 = vector.extract_strided_slice %109 {offsets = [0, 64], sizes = [2, 32], strides = [1, 1]} : vector<2x128xf32> to vector<2x32xf32>
    %113 = vector.extract_strided_slice %109 {offsets = [0, 96], sizes = [2, 32], strides = [1, 1]} : vector<2x128xf32> to vector<2x32xf32>
    %114 = arith.mulf %111, %88 : vector<2x32xf32>
    %115 = arith.mulf %110, %112 : vector<2x32xf32>
    %116 = arith.addf %114, %115 : vector<2x32xf32>
    %117 = math.tanh %116 : vector<2x32xf32>
    %118 = arith.mulf %113, %117 : vector<2x32xf32>
    %119 = arith.index_cast %c3_i32 : i32 to index
    %c0_35 = arith.constant 0 : index
    %c0_36 = arith.constant 0 : index
    %120 = vector.load %arg9[%119, %c0_35, %c0_36] : memref<8x2x32xf32, #tpu.memory_space<vmem>>, vector<1x2x32xf32>
    %121 = vector.shape_cast %120 : vector<1x2x32xf32> to vector<2x32xf32>
    %122 = vector.shape_cast %118 : vector<2x32xf32> to vector<1x2x32xf32>
    tpu.vector_store %arg9[%119, %c0_35, %c0_36], %122 {strides = array<i32>} : memref<8x2x32xf32, #tpu.memory_space<vmem>>, vector<1x2x32xf32>,
    %c4_i32 = arith.constant 4 : i32
    %123 = arith.index_cast %c4_i32 : i32 to index
    %c0_37 = arith.constant 0 : index
    %c0_38 = arith.constant 0 : index
    %124 = vector.load %arg1[%123, %c0_37, %c0_38] : memref<8x2x128xf32, #tpu.memory_space<vmem>>, vector<1x2x128xf32>
    %125 = vector.shape_cast %124 : vector<1x2x128xf32> to vector<2x128xf32>
    %126 = arith.truncf %118 : vector<2x32xf32> to vector<2x32xbf16>
    %cst_39 = arith.constant dense<0.000000e+00> : vector<2x128xf32>
    %127 = tpu.matmul %126, %0, %cst_39 {dimension_numbers = #tpu.dot_dimension_numbers<[1], [0], [0], [1], [0, 0, 1, 1], [], []>} : vector<2x32xbf16>, vector<32x128xbf16>, vector<2x128xf32> -> vector<2x128xf32>
    %128 = arith.addf %125, %127 : vector<2x128xf32>
    %cst_40 = arith.constant 5.000000e-01 : f32
    %129 = vector.broadcast %cst_40 : f32 to vector<2x128xf32>
    %130 = arith.mulf %129, %128 : vector<2x128xf32>
    %131 = arith.select %6, %128, %130 : vector<2x128xi1>, vector<2x128xf32>
    %132 = math.tanh %131 : vector<2x128xf32>
    %cst_41 = arith.constant 1.000000e+00 : f32
    %133 = vector.broadcast %cst_41 : f32 to vector<2x128xf32>
    %134 = arith.addf %132, %133 : vector<2x128xf32>
    %cst_42 = arith.constant 5.000000e-01 : f32
    %135 = vector.broadcast %cst_42 : f32 to vector<2x128xf32>
    %136 = arith.mulf %135, %134 : vector<2x128xf32>
    %137 = arith.select %6, %132, %136 : vector<2x128xi1>, vector<2x128xf32>
    %138 = vector.extract_strided_slice %137 {offsets = [0, 0], sizes = [2, 32], strides = [1, 1]} : vector<2x128xf32> to vector<2x32xf32>
    %139 = vector.extract_strided_slice %137 {offsets = [0, 32], sizes = [2, 32], strides = [1, 1]} : vector<2x128xf32> to vector<2x32xf32>
    %140 = vector.extract_strided_slice %137 {offsets = [0, 64], sizes = [2, 32], strides = [1, 1]} : vector<2x128xf32> to vector<2x32xf32>
    %141 = vector.extract_strided_slice %137 {offsets = [0, 96], sizes = [2, 32], strides = [1, 1]} : vector<2x128xf32> to vector<2x32xf32>
    %142 = arith.mulf %139, %116 : vector<2x32xf32>
    %143 = arith.mulf %138, %140 : vector<2x32xf32>
    %144 = arith.addf %142, %143 : vector<2x32xf32>
    %145 = math.tanh %144 : vector<2x32xf32>
    %146 = arith.mulf %141, %145 : vector<2x32xf32>
    %147 = arith.index_cast %c4_i32 : i32 to index
    %c0_43 = arith.constant 0 : index
    %c0_44 = arith.constant 0 : index
    %148 = vector.load %arg9[%147, %c0_43, %c0_44] : memref<8x2x32xf32, #tpu.memory_space<vmem>>, vector<1x2x32xf32>
    %149 = vector.shape_cast %148 : vector<1x2x32xf32> to vector<2x32xf32>
    %150 = vector.shape_cast %146 : vector<2x32xf32> to vector<1x2x32xf32>
    tpu.vector_store %arg9[%147, %c0_43, %c0_44], %150 {strides = array<i32>} : memref<8x2x32xf32, #tpu.memory_space<vmem>>, vector<1x2x32xf32>,
    %c5_i32 = arith.constant 5 : i32
    %151 = arith.index_cast %c5_i32 : i32 to index
    %c0_45 = arith.constant 0 : index
    %c0_46 = arith.constant 0 : index
    %152 = vector.load %arg1[%151, %c0_45, %c0_46] : memref<8x2x128xf32, #tpu.memory_space<vmem>>, vector<1x2x128xf32>
    %153 = vector.shape_cast %152 : vector<1x2x128xf32> to vector<2x128xf32>
    %154 = arith.truncf %146 : vector<2x32xf32> to vector<2x32xbf16>
    %cst_47 = arith.constant dense<0.000000e+00> : vector<2x128xf32>
    %155 = tpu.matmul %154, %0, %cst_47 {dimension_numbers = #tpu.dot_dimension_numbers<[1], [0], [0], [1], [0, 0, 1, 1], [], []>} : vector<2x32xbf16>, vector<32x128xbf16>, vector<2x128xf32> -> vector<2x128xf32>
    %156 = arith.addf %153, %155 : vector<2x128xf32>
    %cst_48 = arith.constant 5.000000e-01 : f32
    %157 = vector.broadcast %cst_48 : f32 to vector<2x128xf32>
    %158 = arith.mulf %157, %156 : vector<2x128xf32>
    %159 = arith.select %6, %156, %158 : vector<2x128xi1>, vector<2x128xf32>
    %160 = math.tanh %159 : vector<2x128xf32>
    %cst_49 = arith.constant 1.000000e+00 : f32
    %161 = vector.broadcast %cst_49 : f32 to vector<2x128xf32>
    %162 = arith.addf %160, %161 : vector<2x128xf32>
    %cst_50 = arith.constant 5.000000e-01 : f32
    %163 = vector.broadcast %cst_50 : f32 to vector<2x128xf32>
    %164 = arith.mulf %163, %162 : vector<2x128xf32>
    %165 = arith.select %6, %160, %164 : vector<2x128xi1>, vector<2x128xf32>
    %166 = vector.extract_strided_slice %165 {offsets = [0, 0], sizes = [2, 32], strides = [1, 1]} : vector<2x128xf32> to vector<2x32xf32>
    %167 = vector.extract_strided_slice %165 {offsets = [0, 32], sizes = [2, 32], strides = [1, 1]} : vector<2x128xf32> to vector<2x32xf32>
    %168 = vector.extract_strided_slice %165 {offsets = [0, 64], sizes = [2, 32], strides = [1, 1]} : vector<2x128xf32> to vector<2x32xf32>
    %169 = vector.extract_strided_slice %165 {offsets = [0, 96], sizes = [2, 32], strides = [1, 1]} : vector<2x128xf32> to vector<2x32xf32>
    %170 = arith.mulf %167, %144 : vector<2x32xf32>
    %171 = arith.mulf %166, %168 : vector<2x32xf32>
    %172 = arith.addf %170, %171 : vector<2x32xf32>
    %173 = math.tanh %172 : vector<2x32xf32>
    %174 = arith.mulf %169, %173 : vector<2x32xf32>
    %175 = arith.index_cast %c5_i32 : i32 to index
    %c0_51 = arith.constant 0 : index
    %c0_52 = arith.constant 0 : index
    %176 = vector.load %arg9[%175, %c0_51, %c0_52] : memref<8x2x32xf32, #tpu.memory_space<vmem>>, vector<1x2x32xf32>
    %177 = vector.shape_cast %176 : vector<1x2x32xf32> to vector<2x32xf32>
    %178 = vector.shape_cast %174 : vector<2x32xf32> to vector<1x2x32xf32>
    tpu.vector_store %arg9[%175, %c0_51, %c0_52], %178 {strides = array<i32>} : memref<8x2x32xf32, #tpu.memory_space<vmem>>, vector<1x2x32xf32>,
    %c6_i32 = arith.constant 6 : i32
    %179 = arith.index_cast %c6_i32 : i32 to index
    %c0_53 = arith.constant 0 : index
    %c0_54 = arith.constant 0 : index
    %180 = vector.load %arg1[%179, %c0_53, %c0_54] : memref<8x2x128xf32, #tpu.memory_space<vmem>>, vector<1x2x128xf32>
    %181 = vector.shape_cast %180 : vector<1x2x128xf32> to vector<2x128xf32>
    %182 = arith.truncf %174 : vector<2x32xf32> to vector<2x32xbf16>
    %cst_55 = arith.constant dense<0.000000e+00> : vector<2x128xf32>
    %183 = tpu.matmul %182, %0, %cst_55 {dimension_numbers = #tpu.dot_dimension_numbers<[1], [0], [0], [1], [0, 0, 1, 1], [], []>} : vector<2x32xbf16>, vector<32x128xbf16>, vector<2x128xf32> -> vector<2x128xf32>
    %184 = arith.addf %181, %183 : vector<2x128xf32>
    %cst_56 = arith.constant 5.000000e-01 : f32
    %185 = vector.broadcast %cst_56 : f32 to vector<2x128xf32>
    %186 = arith.mulf %185, %184 : vector<2x128xf32>
    %187 = arith.select %6, %184, %186 : vector<2x128xi1>, vector<2x128xf32>
    %188 = math.tanh %187 : vector<2x128xf32>
    %cst_57 = arith.constant 1.000000e+00 : f32
    %189 = vector.broadcast %cst_57 : f32 to vector<2x128xf32>
    %190 = arith.addf %188, %189 : vector<2x128xf32>
    %cst_58 = arith.constant 5.000000e-01 : f32
    %191 = vector.broadcast %cst_58 : f32 to vector<2x128xf32>
    %192 = arith.mulf %191, %190 : vector<2x128xf32>
    %193 = arith.select %6, %188, %192 : vector<2x128xi1>, vector<2x128xf32>
    %194 = vector.extract_strided_slice %193 {offsets = [0, 0], sizes = [2, 32], strides = [1, 1]} : vector<2x128xf32> to vector<2x32xf32>
    %195 = vector.extract_strided_slice %193 {offsets = [0, 32], sizes = [2, 32], strides = [1, 1]} : vector<2x128xf32> to vector<2x32xf32>
    %196 = vector.extract_strided_slice %193 {offsets = [0, 64], sizes = [2, 32], strides = [1, 1]} : vector<2x128xf32> to vector<2x32xf32>
    %197 = vector.extract_strided_slice %193 {offsets = [0, 96], sizes = [2, 32], strides = [1, 1]} : vector<2x128xf32> to vector<2x32xf32>
    %198 = arith.mulf %195, %172 : vector<2x32xf32>
    %199 = arith.mulf %194, %196 : vector<2x32xf32>
    %200 = arith.addf %198, %199 : vector<2x32xf32>
    %201 = math.tanh %200 : vector<2x32xf32>
    %202 = arith.mulf %197, %201 : vector<2x32xf32>
    %203 = arith.index_cast %c6_i32 : i32 to index
    %c0_59 = arith.constant 0 : index
    %c0_60 = arith.constant 0 : index
    %204 = vector.load %arg9[%203, %c0_59, %c0_60] : memref<8x2x32xf32, #tpu.memory_space<vmem>>, vector<1x2x32xf32>
    %205 = vector.shape_cast %204 : vector<1x2x32xf32> to vector<2x32xf32>
    %206 = vector.shape_cast %202 : vector<2x32xf32> to vector<1x2x32xf32>
    tpu.vector_store %arg9[%203, %c0_59, %c0_60], %206 {strides = array<i32>} : memref<8x2x32xf32, #tpu.memory_space<vmem>>, vector<1x2x32xf32>,
    %c7_i32 = arith.constant 7 : i32
    %207 = arith.index_cast %c7_i32 : i32 to index
    %c0_61 = arith.constant 0 : index
    %c0_62 = arith.constant 0 : index
    %208 = vector.load %arg1[%207, %c0_61, %c0_62] : memref<8x2x128xf32, #tpu.memory_space<vmem>>, vector<1x2x128xf32>
    %209 = vector.shape_cast %208 : vector<1x2x128xf32> to vector<2x128xf32>
    %210 = arith.truncf %202 : vector<2x32xf32> to vector<2x32xbf16>
    %cst_63 = arith.constant dense<0.000000e+00> : vector<2x128xf32>
    %211 = tpu.matmul %210, %0, %cst_63 {dimension_numbers = #tpu.dot_dimension_numbers<[1], [0], [0], [1], [0, 0, 1, 1], [], []>} : vector<2x32xbf16>, vector<32x128xbf16>, vector<2x128xf32> -> vector<2x128xf32>
    %212 = arith.addf %209, %211 : vector<2x128xf32>
    %cst_64 = arith.constant 5.000000e-01 : f32
    %213 = vector.broadcast %cst_64 : f32 to vector<2x128xf32>
    %214 = arith.mulf %213, %212 : vector<2x128xf32>
    %215 = arith.select %6, %212, %214 : vector<2x128xi1>, vector<2x128xf32>
    %216 = math.tanh %215 : vector<2x128xf32>
    %cst_65 = arith.constant 1.000000e+00 : f32
    %217 = vector.broadcast %cst_65 : f32 to vector<2x128xf32>
    %218 = arith.addf %216, %217 : vector<2x128xf32>
    %cst_66 = arith.constant 5.000000e-01 : f32
    %219 = vector.broadcast %cst_66 : f32 to vector<2x128xf32>
    %220 = arith.mulf %219, %218 : vector<2x128xf32>
    %221 = arith.select %6, %216, %220 : vector<2x128xi1>, vector<2x128xf32>
    %222 = vector.extract_strided_slice %221 {offsets = [0, 0], sizes = [2, 32], strides = [1, 1]} : vector<2x128xf32> to vector<2x32xf32>
    %223 = vector.extract_strided_slice %221 {offsets = [0, 32], sizes = [2, 32], strides = [1, 1]} : vector<2x128xf32> to vector<2x32xf32>
    %224 = vector.extract_strided_slice %221 {offsets = [0, 64], sizes = [2, 32], strides = [1, 1]} : vector<2x128xf32> to vector<2x32xf32>
    %225 = vector.extract_strided_slice %221 {offsets = [0, 96], sizes = [2, 32], strides = [1, 1]} : vector<2x128xf32> to vector<2x32xf32>
    %226 = arith.mulf %223, %200 : vector<2x32xf32>
    %227 = arith.mulf %222, %224 : vector<2x32xf32>
    %228 = arith.addf %226, %227 : vector<2x32xf32>
    %229 = math.tanh %228 : vector<2x32xf32>
    %230 = arith.mulf %225, %229 : vector<2x32xf32>
    %231 = arith.index_cast %c7_i32 : i32 to index
    %c0_67 = arith.constant 0 : index
    %c0_68 = arith.constant 0 : index
    %232 = vector.load %arg9[%231, %c0_67, %c0_68] : memref<8x2x32xf32, #tpu.memory_space<vmem>>, vector<1x2x32xf32>
    %233 = vector.shape_cast %232 : vector<1x2x32xf32> to vector<2x32xf32>
    %234 = vector.shape_cast %230 : vector<2x32xf32> to vector<1x2x32xf32>
    tpu.vector_store %arg9[%231, %c0_67, %c0_68], %234 {strides = array<i32>} : memref<8x2x32xf32, #tpu.memory_space<vmem>>, vector<1x2x32xf32>,
    %c8_i32 = arith.constant 8 : i32
    %c0_69 = arith.constant 0 : index
    %c0_70 = arith.constant 0 : index
    %235 = vector.load %arg7[%c0_69, %c0_70] : memref<2x32xf32, #tpu.memory_space<vmem>>, vector<2x32xf32>
    tpu.vector_store %arg7[%c0_69, %c0_70], %230 {strides = array<i32>} : memref<2x32xf32, #tpu.memory_space<vmem>>, vector<2x32xf32>,
    %c0_71 = arith.constant 0 : index
    %c0_72 = arith.constant 0 : index
    %236 = vector.load %arg8[%c0_71, %c0_72] : memref<2x32xf32, #tpu.memory_space<vmem>>, vector<2x32xf32>
    tpu.vector_store %arg8[%c0_71, %c0_72], %228 {strides = array<i32>} : memref<2x32xf32, #tpu.memory_space<vmem>>, vector<2x32xf32>,
    %c0_73 = arith.constant 0 : index
    %c0_74 = arith.constant 0 : index
    %c0_75 = arith.constant 0 : index
    %237 = vector.load %arg9[%c0_73, %c0_74, %c0_75] : memref<8x2x32xf32, #tpu.memory_space<vmem>>, vector<8x2x32xf32>
    %c0_76 = arith.constant 0 : index
    %c0_77 = arith.constant 0 : index
    %c0_78 = arith.constant 0 : index
    %238 = vector.load %arg5[%c0_76, %c0_77, %c0_78] : memref<8x2x32xf32, #tpu.memory_space<vmem>>, vector<8x2x32xf32>
    %239 = arith.mulf %237, %238 : vector<8x2x32xf32>
    %c0_79 = arith.constant 0 : index
    %c0_80 = arith.constant 0 : index
    %c0_81 = arith.constant 0 : index
    %240 = vector.load %arg4[%c0_79, %c0_80, %c0_81] : memref<1x1x32xf32, #tpu.memory_space<vmem>>, vector<1x1x32xf32>
    %241 = vector.broadcast %240 : vector<1x1x32xf32> to vector<8x2x32xf32>
    %242 = arith.mulf %239, %241 : vector<8x2x32xf32>
    %cst_82 = arith.constant dense<0.000000e+00> : vector<8x2xf32>
    %243 = vector.multi_reduction <add>, %242, %cst_82 [2] : vector<8x2x32xf32> to vector<8x2xf32>
    %c0_83 = arith.constant 0 : index
    %244 = memref.load %arg0[%c0_83] : memref<1xf32, #tpu.memory_space<smem>>
    %245 = vector.broadcast %244 : f32 to vector<8x2xf32>
    %246 = arith.addf %243, %245 : vector<8x2xf32>
    %c0_84 = arith.constant 0 : index
    %c0_85 = arith.constant 0 : index
    %247 = vector.load %arg6[%c0_84, %c0_85] : memref<8x2xf32, #tpu.memory_space<vmem>>, vector<8x2xf32>
    tpu.vector_store %arg6[%c0_84, %c0_85], %246 {strides = array<i32>} : memref<8x2xf32, #tpu.memory_space<vmem>>, vector<8x2xf32>,
    return
  }
}

</mosaic_0001>

<llo_original>
// kernel: tpu_custom_call.1
$region0: #{tpu_custom_call.1}
  #allocation0 [shape = 'u32[]', space=smem, size = 0x4, offset = 0x4, fixed_abs, tag = 'smem constant byte address 0x4 - core index']
  #allocation1 [shape = 'u32[144,128]{1,0:T(1,128)}', space=vmem, size = 0x12000, scoped, tag = 'internal scratch']
  #allocation2 [shape = 'f32[8,2,32]{2,1,0:T(2,128)}', space=vmem, size = 0x2000, scoped, tag = 'scratch operand']
  #allocation3 [shape = 'f32[1]{0:T(128)S(6)}', space=smem, size = 0x200, scoped, tag = 'scoped memory for tpu_custom_call.1']
  %s0 = inlined_call_operand.<no memory space> [shape: f32[1], index: 0, kind: input, shape index: {}]
  %s1 = inlined_call_operand.hbm [shape: f32[8,2,128], index: 1, kind: input, shape index: {}]
  %s2 = inlined_call_operand.hbm [shape: f32[2,2,32], index: 2, kind: input, shape index: {}]
  %s3 = inlined_call_operand.hbm [shape: bf16[32,128], index: 3, kind: input, shape index: {}]
  %s4 = inlined_call_operand.vmem [shape: f32[1,1,32], index: 4, kind: input, shape index: {}]
  %s5 = inlined_call_operand.vmem [shape: f32[8,2,32], index: 5, kind: input, shape index: {}]
  %s6 = inlined_call_operand.vmem [shape: f32[8,2], index: 6, kind: output, shape index: {0}]
  %s7 = inlined_call_operand.hbm [shape: f32[2,32], index: 7, kind: output, shape index: {1}]
  %s8 = inlined_call_operand.hbm [shape: f32[2,32], index: 8, kind: output, shape index: {2}]
  %9 = xla_tuple %s6, %s7, %s8
  %s10 = sld [smem:[#allocation0]]
  $region62: #{tpu_custom_call.1} parent=0
    _
  %s12 = ssub.s32 1, %s10
  %s13 = scalar_select 0, %s12, %s10
  %14 = sst [smem:[#allocation3]] %s0
  $region1: #{tpu_custom_call.1} parent=0
    #allocation4 [shape = 'u8[8192]{0}', space=vmem, size = 0x2000, scoped, tag = 'input window, operand 1, single buffered']
    #allocation5 [shape = 's32[1]{0}', space=sflag, size = 0x4, scoped, tag = 'scoped memory for tpu_custom_call.1']
    #allocation6 [shape = 's32[1]{0}', space=sflag, size = 0x4, scoped, tag = 'scoped memory for tpu_custom_call.1']
    #allocation7 [shape = 'u8[2048]{0}', space=vmem, size = 0x800, scoped, tag = 'input window, operand 2, single buffered']
    #allocation8 [shape = 's32[1]{0}', space=sflag, size = 0x4, scoped, tag = 'scoped memory for tpu_custom_call.1']
    #allocation9 [shape = 'u8[8192]{0}', space=vmem, size = 0x2000, scoped, tag = 'input window, operand 3, single buffered']
    #allocation10 [shape = 'u8[1024]{0}', space=vmem, size = 0x400, scoped, tag = 'output window, operand 1, single buffered']
    #allocation11 [shape = 'u8[1024]{0}', space=vmem, size = 0x400, scoped, tag = 'output window, operand 2, single buffered']
    #allocation12 [shape = 's32[1]{0}', space=sflag, size = 0x4, scoped, tag = 'scoped memory for tpu_custom_call.1']
    %15 = vsyncpa [#allocation5], 0
    %16 = vsyncpa [#allocation8], 0
    %17 = vsyncpa [#allocation6], 0
    %18 = vsyncpa [#allocation12], 0
    // Predicated region
    $region2: #{tpu_custom_call.1} parent=1 // pred_check
      _
    $region3: #{tpu_custom_call.1} parent=1 // pred_check_branch
      %20 = sbr.rel (0) target = $region5
    $region4: #{tpu_custom_call.1} parent=1 // pred_region
      _
    $region5: #{tpu_custom_call.1} parent=1 // pred_fallthru
      _
    // Predicated region
    $region6: #{tpu_custom_call.1} parent=1 // pred_check
      _
    $region7: #{tpu_custom_call.1} parent=1 // pred_check_branch
      %22 = sbr.rel (0) target = $region9
    $region8: #{tpu_custom_call.1} parent=1 // pred_region
      %s24 = ssub.s32 256, 256
      %25 = vsyncadd [#allocation5], %s24
      %s26 = sshll.u32 [#allocation4], 4
      %s27 = int_to_ptr.vmem [resolvable:$true] %s26
      %32 = dma.hbm_to_vmem [thread:$0]  %s1, 256, %s27, [#allocation5], 32, 32, 2
    $region9: #{tpu_custom_call.1} parent=1 // pred_fallthru
      _
    // Predicated region
    $region10: #{tpu_custom_call.1} parent=1 // pred_check
      _
    $region11: #{tpu_custom_call.1} parent=1 // pred_check_branch
      %34 = sbr.rel (0) target = $region13
    $region12: #{tpu_custom_call.1} parent=1 // pred_region
      %s36 = ssub.s32 64, 64
      %37 = vsyncadd [#allocation8], %s36
      %s38 = sshll.u32 [#allocation7], 4
      %s39 = int_to_ptr.vmem [resolvable:$true] %s38
      %44 = dma.hbm_to_vmem [thread:$0]  %s2, 64, %s39, [#allocation8], 32, 32, 2
    $region13: #{tpu_custom_call.1} parent=1 // pred_fallthru
      _
    // Predicated region
    $region14: #{tpu_custom_call.1} parent=1 // pred_check
      _
    $region15: #{tpu_custom_call.1} parent=1 // pred_check_branch
      %46 = sbr.rel (0) target = $region17
    $region16: #{tpu_custom_call.1} parent=1 // pred_region
      %s48 = ssub.s32 256, 256
      %49 = vsyncadd [#allocation8], %s48
      %s50 = sshll.u32 [#allocation9], 4
      %s51 = int_to_ptr.vmem [resolvable:$true] %s50
      %56 = dma.hbm_to_vmem [thread:$0]  %s3, 256, %s51, [#allocation8], 64, 64, 4
    $region17: #{tpu_custom_call.1} parent=1 // pred_fallthru
      _
    // Predicated region
    $region18: #{tpu_custom_call.1} parent=1 // pred_check
      _
    $region19: #{tpu_custom_call.1} parent=1 // pred_check_branch
      %58 = sbr.rel (0) target = $region21
    $region20: #{tpu_custom_call.1} parent=1 // pred_region
      _
    $region21: #{tpu_custom_call.1} parent=1 // pred_fallthru
      _
    // Predicated region
    $region22: #{tpu_custom_call.1} parent=1 // pred_check
      _
    $region23: #{tpu_custom_call.1} parent=1 // pred_check_branch
      %60 = sbr.rel (0) target = $region25
    $region24: #{tpu_custom_call.1} parent=1 // pred_region
      _
    $region25: #{tpu_custom_call.1} parent=1 // pred_fallthru
      _
    // Predicated region
    $region26: #{tpu_custom_call.1} parent=1 // pred_check
      _
    $region27: #{tpu_custom_call.1} parent=1 // pred_check_branch
      %62 = sbr.rel (0) target = $region29
    $region28: #{tpu_custom_call.1} parent=1 // pred_region
      %63 = dma.done [#allocation5], 256
    $region29: #{tpu_custom_call.1} parent=1 // pred_fallthru
      _
    // Predicated region
    $region30: #{tpu_custom_call.1} parent=1 // pred_check
      _
    $region31: #{tpu_custom_call.1} parent=1 // pred_check_branch
      %65 = sbr.rel (0) target = $region33
    $region32: #{tpu_custom_call.1} parent=1 // pred_region
      %66 = dma.done [#allocation8], 64
    $region33: #{tpu_custom_call.1} parent=1 // pred_fallthru
      _
    // Predicated region
    $region34: #{tpu_custom_call.1} parent=1 // pred_check
      _
    $region35: #{tpu_custom_call.1} parent=1 // pred_check_branch
      %68 = sbr.rel (0) target = $region37
    $region36: #{tpu_custom_call.1} parent=1 // pred_region
      %69 = dma.done [#allocation8], 256
    $region37: #{tpu_custom_call.1} parent=1 // pred_fallthru
      _
    %v71 = vld [vmem:[#allocation9] sm:$0xf]
    %v72 = vld [vmem:[#allocation9 + $0x4] sm:$0xf]
    %v73 = vld [vmem:[#allocation9 + $0x8] sm:$0xf]
    %v74 = vld [vmem:[#allocation9 + $0xc] sm:$0xf]
    %v75 = vlaneseq
    %v76 = vand.u32 %v75, 127
    %vm77 = vcmp.ge.s32.totalorder %v76, 64
    %vm78 = vcmp.lt.s32.totalorder %v76, 96
    %vm79 = vmand %vm77, %vm78
    %v80 = vld [vmem:[#allocation7] sm:$0x3]
    %s81 = scalar_lea.vmem [#allocation7], 2
    %v82 = vld [vmem:[%s81] sm:$0x3]
    %v83 = vld [vmem:[#allocation4] sm:$0x3]
    %v84 = vpack.c.bf16 %v80, %v80
    %v89 = vunpack.c.l.b16 %v71
    %v90 = vunpack.c.l.b16 %v72
    %v91 = vunpack.c.l.b16 %v73
    %v92 = vunpack.c.l.b16 %v74
    %v93 = vpack.c.b16 %v90, %v89
    %v94 = vpack.c.b16 %v92, %v91
    %vm97 = vcmask 261120
    %v99 = vsel %vm97, %v84, 0
    %101 = vmatprep.subr.bf16.mxu0 0
    %102 = vmatpush1.bf16.msra.mxu0 %v93
    %103 = vmatprep.subr.bf16.mxu0 0
    %104 = vmatpush1.bf16.msra.mxu0 %v94
    %105 = vmatprep.subr.bf16.mxu0 0
    %106 = vmatpush1.bf16.msra.mxu0 0
    %107 = vmatprep.subr.bf16.mxu0 0
    %108 = vmatpush1.bf16.msra.mxu0 0
    %109 = vmatprep.subr.bf16.mxu0 0
    %110 = vmatpush1.bf16.msra.mxu0 0
    %111 = vmatprep.subr.bf16.mxu0 0
    %112 = vmatpush1.bf16.msra.mxu0 0
    %113 = vmatprep.subr.bf16.mxu0 0
    %114 = vmatpush1.bf16.msra.mxu0 0
    %115 = vmatprep.subr.bf16.mxu0 0
    %116 = vmatpush1.bf16.msra.mxu0 0
    %117 = vmatprep.subr.bf16.mxu0 0
    %118 = vmatpush1.bf16.msra.mxu0 0
    %119 = vmatprep.subr.bf16.mxu0 0
    %120 = vmatpush1.bf16.msra.mxu0 0
    %121 = vmatprep.subr.bf16.mxu0 0
    %122 = vmatpush1.bf16.msra.mxu0 0
    %123 = vmatprep.subr.bf16.mxu0 0
    %124 = vmatpush1.bf16.msra.mxu0 0
    %125 = vmatprep.subr.bf16.mxu0 0
    %126 = vmatpush1.bf16.msra.mxu0 0
    %127 = vmatprep.subr.bf16.mxu0 0
    %128 = vmatpush1.bf16.msra.mxu0 0
    %129 = vmatprep.subr.bf16.mxu0 0
    %130 = vmatpush1.bf16.msra.mxu0 0
    %131 = vmatprep.subr.bf16.mxu0 0
    %132 = vmatpush1.bf16.msra.mxu0 0
    %133 = vmatprep.mubr.bf16.mxu0 0
    %134 = vmatmul.mubr.bf16.gmra.mrb[0].mxu0 %v99
    %v135 = vpop.f32.mrb[0].mxu0
    %v136 = vadd.f32 0.0, %v135
    %v137 = vpop.f32.mrb[0].mxu0
    %v138 = vpop.f32.mrb[0].mxu0
    %v139 = vpop.f32.mrb[0].mxu0
    %140 = vdwg.mxu0
    %v141 = vadd.f32 %v83, %v136
    %v142 = vmul.f32 %v141, 0.5
    %v143 = vsel %vm79, %v141, %v142
    %v144 = vtanh.pop %v143
    %v145 = vadd.f32 %v144, 1.0
    %v146 = vmul.f32 %v145, 0.5
    %v147 = vsel %vm79, %v144, %v146
    %149 = vrot.lane.b32.xlu0 %v82, 32
    %v150 = vpop.permute.xlu0 %149
    %v152 = vmul.f32 %v147, %v150
    %154 = vrot.lane.b32.xlu0 %v147, 64
    %v155 = vpop.permute.xlu0 %154
    %v157 = vmul.f32 %v147, %v155
    %159 = vrot.lane.b32.xlu0 %v157, 32
    %v160 = vpop.permute.xlu0 %159
    %v162 = vadd.f32 %v152, %v160
    %v163 = vtanh.pop %v162
    %165 = vrot.lane.b32.xlu0 %v163, 64
    %v166 = vpop.permute.xlu0 %165
    %v168 = vmul.f32 %v147, %v166
    %170 = vrot.lane.b32.xlu0 %v168, 32
    %v171 = vpop.permute.xlu0 %170
    %vm173 = vcmask 254976
    %174 = vst.msk [vmem:[#allocation2] sm:$0x3] %vm173, %v171
    %s175 = scalar_lea.vmem [#allocation4], 2
    %v176 = vld [vmem:[%s175] sm:$0x3]
    %v177 = vpack.c.bf16 %v168, %v168
    %179 = vrot.lane.b32.xlu0 %v177, 32
    %v180 = vpop.permute.xlu0 %179
    %v182 = vsel %vm97, %v180, 0
    %184 = vmatprep.subr.bf16.mxu0 0
    %185 = vmatpush1.bf16.msra.mxu0 %v93
    %186 = vmatprep.subr.bf16.mxu0 0
    %187 = vmatpush1.bf16.msra.mxu0 %v94
    %188 = vmatprep.subr.bf16.mxu0 0
    %189 = vmatpush1.bf16.msra.mxu0 0
    %190 = vmatprep.subr.bf16.mxu0 0
    %191 = vmatpush1.bf16.msra.mxu0 0
    %192 = vmatprep.subr.bf16.mxu0 0
    %193 = vmatpush1.bf16.msra.mxu0 0
    %194 = vmatprep.subr.bf16.mxu0 0
    %195 = vmatpush1.bf16.msra.mxu0 0
    %196 = vmatprep.subr.bf16.mxu0 0
    %197 = vmatpush1.bf16.msra.mxu0 0
    %198 = vmatprep.subr.bf16.mxu0 0
    %199 = vmatpush1.bf16.msra.mxu0 0
    %200 = vmatprep.subr.bf16.mxu0 0
    %201 = vmatpush1.bf16.msra.mxu0 0
    %202 = vmatprep.subr.bf16.mxu0 0
    %203 = vmatpush1.bf16.msra.mxu0 0
    %204 = vmatprep.subr.bf16.mxu0 0
    %205 = vmatpush1.bf16.msra.mxu0 0
    %206 = vmatprep.subr.bf16.mxu0 0
    %207 = vmatpush1.bf16.msra.mxu0 0
    %208 = vmatprep.subr.bf16.mxu0 0
    %209 = vmatpush1.bf16.msra.mxu0 0
    %210 = vmatprep.subr.bf16.mxu0 0
    %211 = vmatpush1.bf16.msra.mxu0 0
    %212 = vmatprep.subr.bf16.mxu0 0
    %213 = vmatpush1.bf16.msra.mxu0 0
    %214 = vmatprep.subr.bf16.mxu0 0
    %215 = vmatpush1.bf16.msra.mxu0 0
    %216 = vmatprep.mubr.bf16.mxu0 0
    %217 = vmatmul.mubr.bf16.gmra.mrb[0].mxu0 %v182
    %v218 = vpop.f32.mrb[0].mxu0
    %v219 = vadd.f32 0.0, %v218
    %v220 = vpop.f32.mrb[0].mxu0
    %v221 = vpop.f32.mrb[0].mxu0
    %v222 = vpop.f32.mrb[0].mxu0
    %223 = vdwg.mxu0
    %v224 = vadd.f32 %v176, %v219
    %v225 = vmul.f32 %v224, 0.5
    %v226 = vsel %vm79, %v224, %v225
    %v227 = vtanh.pop %v226
    %v228 = vadd.f32 %v227, 1.0
    %v229 = vmul.f32 %v228, 0.5
    %v230 = vsel %vm79, %v227, %v229
    %v231 = vmul.f32 %v230, %v162
    %233 = vrot.lane.b32.xlu0 %v230, 64
    %v234 = vpop.permute.xlu0 %233
    %v236 = vmul.f32 %v230, %v234
    %238 = vrot.lane.b32.xlu0 %v236, 32
    %v239 = vpop.permute.xlu0 %238
    %v241 = vadd.f32 %v231, %v239
    %v242 = vtanh.pop %v241
    %244 = vrot.lane.b32.xlu0 %v242, 64
    %v245 = vpop.permute.xlu0 %244
    %v247 = vmul.f32 %v230, %v245
    %249 = vrot.lane.b32.xlu0 %v247, 32
    %v250 = vpop.permute.xlu0 %249
    %s252 = scalar_lea.vmem [#allocation2], 2
    %253 = vst.msk [vmem:[%s252] sm:$0x3] %vm173, %v250
    %s254 = scalar_lea.vmem [#allocation4], 4
    %v255 = vld [vmem:[%s254] sm:$0x3]
    %v256 = vpack.c.bf16 %v247, %v247
    %258 = vrot.lane.b32.xlu0 %v256, 32
    %v259 = vpop.permute.xlu0 %258
    %v261 = vsel %vm97, %v259, 0
    %263 = vmatprep.subr.bf16.mxu0 0
    %264 = vmatpush1.bf16.msra.mxu0 %v93
    %265 = vmatprep.subr.bf16.mxu0 0
    %266 = vmatpush1.bf16.msra.mxu0 %v94
    %267 = vmatprep.subr.bf16.mxu0 0
    %268 = vmatpush1.bf16.msra.mxu0 0
    %269 = vmatprep.subr.bf16.mxu0 0
    %270 = vmatpush1.bf16.msra.mxu0 0
    %271 = vmatprep.subr.bf16.mxu0 0
    %272 = vmatpush1.bf16.msra.mxu0 0
    %273 = vmatprep.subr.bf16.mxu0 0
    %274 = vmatpush1.bf16.msra.mxu0 0
    %275 = vmatprep.subr.bf16.mxu0 0
    %276 = vmatpush1.bf16.msra.mxu0 0
    %277 = vmatprep.subr.bf16.mxu0 0
    %278 = vmatpush1.bf16.msra.mxu0 0
    %279 = vmatprep.subr.bf16.mxu0 0
    %280 = vmatpush1.bf16.msra.mxu0 0
    %281 = vmatprep.subr.bf16.mxu0 0
    %282 = vmatpush1.bf16.msra.mxu0 0
    %283 = vmatprep.subr.bf16.mxu0 0
    %284 = vmatpush1.bf16.msra.mxu0 0
    %285 = vmatprep.subr.bf16.mxu0 0
    %286 = vmatpush1.bf16.msra.mxu0 0
    %287 = vmatprep.subr.bf16.mxu0 0
    %288 = vmatpush1.bf16.msra.mxu0 0
    %289 = vmatprep.subr.bf16.mxu0 0
    %290 = vmatpush1.bf16.msra.mxu0 0
    %291 = vmatprep.subr.bf16.mxu0 0
    %292 = vmatpush1.bf16.msra.mxu0 0
    %293 = vmatprep.subr.bf16.mxu0 0
    %294 = vmatpush1.bf16.msra.mxu0 0
    %295 = vmatprep.mubr.bf16.mxu0 0
    %296 = vmatmul.mubr.bf16.gmra.mrb[0].mxu0 %v261
    %v297 = vpop.f32.mrb[0].mxu0
    %v298 = vadd.f32 0.0, %v297
    %v299 = vpop.f32.mrb[0].mxu0
    %v300 = vpop.f32.mrb[0].mxu0
    %v301 = vpop.f32.mrb[0].mxu0
    %302 = vdwg.mxu0
    %v303 = vadd.f32 %v255, %v298
    %v304 = vmul.f32 %v303, 0.5
    %v305 = vsel %vm79, %v303, %v304
    %v306 = vtanh.pop %v305
    %v307 = vadd.f32 %v306, 1.0
    %v308 = vmul.f32 %v307, 0.5
    %v309 = vsel %vm79, %v306, %v308
    %v310 = vmul.f32 %v309, %v241
    %312 = vrot.lane.b32.xlu0 %v309, 64
    %v313 = vpop.permute.xlu0 %312
    %v315 = vmul.f32 %v309, %v313
    %317 = vrot.lane.b32.xlu0 %v315, 32
    %v318 = vpop.permute.xlu0 %317
    %v320 = vadd.f32 %v310, %v318
    %v321 = vtanh.pop %v320
    %323 = vrot.lane.b32.xlu0 %v321, 64
    %v324 = vpop.permute.xlu0 %323
    %v326 = vmul.f32 %v309, %v324
    %328 = vrot.lane.b32.xlu0 %v326, 32
    %v329 = vpop.permute.xlu0 %328
    %s331 = scalar_lea.vmem [#allocation2], 4
    %332 = vst.msk [vmem:[%s331] sm:$0x3] %vm173, %v329
    %s333 = scalar_lea.vmem [#allocation4], 6
    %v334 = vld [vmem:[%s333] sm:$0x3]
    %v335 = vpack.c.bf16 %v326, %v326
    %337 = vrot.lane.b32.xlu0 %v335, 32
    %v338 = vpop.permute.xlu0 %337
    %v340 = vsel %vm97, %v338, 0
    %342 = vmatprep.subr.bf16.mxu0 0
    %343 = vmatpush1.bf16.msra.mxu0 %v93
    %344 = vmatprep.subr.bf16.mxu0 0
    %345 = vmatpush1.bf16.msra.mxu0 %v94
    %346 = vmatprep.subr.bf16.mxu0 0
    %347 = vmatpush1.bf16.msra.mxu0 0
    %348 = vmatprep.subr.bf16.mxu0 0
    %349 = vmatpush1.bf16.msra.mxu0 0
    %350 = vmatprep.subr.bf16.mxu0 0
    %351 = vmatpush1.bf16.msra.mxu0 0
    %352 = vmatprep.subr.bf16.mxu0 0
    %353 = vmatpush1.bf16.msra.mxu0 0
    %354 = vmatprep.subr.bf16.mxu0 0
    %355 = vmatpush1.bf16.msra.mxu0 0
    %356 = vmatprep.subr.bf16.mxu0 0
    %357 = vmatpush1.bf16.msra.mxu0 0
    %358 = vmatprep.subr.bf16.mxu0 0
    %359 = vmatpush1.bf16.msra.mxu0 0
    %360 = vmatprep.subr.bf16.mxu0 0
    %361 = vmatpush1.bf16.msra.mxu0 0
    %362 = vmatprep.subr.bf16.mxu0 0
    %363 = vmatpush1.bf16.msra.mxu0 0
    %364 = vmatprep.subr.bf16.mxu0 0
    %365 = vmatpush1.bf16.msra.mxu0 0
    %366 = vmatprep.subr.bf16.mxu0 0
    %367 = vmatpush1.bf16.msra.mxu0 0
    %368 = vmatprep.subr.bf16.mxu0 0
    %369 = vmatpush1.bf16.msra.mxu0 0
    %370 = vmatprep.subr.bf16.mxu0 0
    %371 = vmatpush1.bf16.msra.mxu0 0
    %372 = vmatprep.subr.bf16.mxu0 0
    %373 = vmatpush1.bf16.msra.mxu0 0
    %374 = vmatprep.mubr.bf16.mxu0 0
    %375 = vmatmul.mubr.bf16.gmra.mrb[0].mxu0 %v340
    %v376 = vpop.f32.mrb[0].mxu0
    %v377 = vadd.f32 0.0, %v376
    %v378 = vpop.f32.mrb[0].mxu0
    %v379 = vpop.f32.mrb[0].mxu0
    %v380 = vpop.f32.mrb[0].mxu0
    %381 = vdwg.mxu0
    %v382 = vadd.f32 %v334, %v377
    %v383 = vmul.f32 %v382, 0.5
    %v384 = vsel %vm79, %v382, %v383
    %v385 = vtanh.pop %v384
    %v386 = vadd.f32 %v385, 1.0
    %v387 = vmul.f32 %v386, 0.5
    %v388 = vsel %vm79, %v385, %v387
    %v389 = vmul.f32 %v388, %v320
    %391 = vrot.lane.b32.xlu0 %v388, 64
    %v392 = vpop.permute.xlu0 %391
    %v394 = vmul.f32 %v388, %v392
    %396 = vrot.lane.b32.xlu0 %v394, 32
    %v397 = vpop.permute.xlu0 %396
    %v399 = vadd.f32 %v389, %v397
    %v400 = vtanh.pop %v399
    %402 = vrot.lane.b32.xlu0 %v400, 64
    %v403 = vpop.permute.xlu0 %402
    %v405 = vmul.f32 %v388, %v403
    %407 = vrot.lane.b32.xlu0 %v405, 32
    %v408 = vpop.permute.xlu0 %407
    %s410 = scalar_lea.vmem [#allocation2], 6
    %411 = vst.msk [vmem:[%s410] sm:$0x3] %vm173, %v408
    %s412 = scalar_lea.vmem [#allocation4], 8
    %v413 = vld [vmem:[%s412] sm:$0x3]
    %v414 = vpack.c.bf16 %v405, %v405
    %416 = vrot.lane.b32.xlu0 %v414, 32
    %v417 = vpop.permute.xlu0 %416
    %v419 = vsel %vm97, %v417, 0
    %421 = vmatprep.subr.bf16.mxu0 0
    %422 = vmatpush1.bf16.msra.mxu0 %v93
    %423 = vmatprep.subr.bf16.mxu0 0
    %424 = vmatpush1.bf16.msra.mxu0 %v94
    %425 = vmatprep.subr.bf16.mxu0 0
    %426 = vmatpush1.bf16.msra.mxu0 0
    %427 = vmatprep.subr.bf16.mxu0 0
    %428 = vmatpush1.bf16.msra.mxu0 0
    %429 = vmatprep.subr.bf16.mxu0 0
    %430 = vmatpush1.bf16.msra.mxu0 0
    %431 = vmatprep.subr.bf16.mxu0 0
    %432 = vmatpush1.bf16.msra.mxu0 0
    %433 = vmatprep.subr.bf16.mxu0 0
    %434 = vmatpush1.bf16.msra.mxu0 0
    %435 = vmatprep.subr.bf16.mxu0 0
    %436 = vmatpush1.bf16.msra.mxu0 0
    %437 = vmatprep.subr.bf16.mxu0 0
    %438 = vmatpush1.bf16.msra.mxu0 0
    %439 = vmatprep.subr.bf16.mxu0 0
    %440 = vmatpush1.bf16.msra.mxu0 0
    %441 = vmatprep.subr.bf16.mxu0 0
    %442 = vmatpush1.bf16.msra.mxu0 0
    %443 = vmatprep.subr.bf16.mxu0 0
    %444 = vmatpush1.bf16.msra.mxu0 0
    %445 = vmatprep.subr.bf16.mxu0 0
    %446 = vmatpush1.bf16.msra.mxu0 0
    %447 = vmatprep.subr.bf16.mxu0 0
    %448 = vmatpush1.bf16.msra.mxu0 0
    %449 = vmatprep.subr.bf16.mxu0 0
    %450 = vmatpush1.bf16.msra.mxu0 0
    %451 = vmatprep.subr.bf16.mxu0 0
    %452 = vmatpush1.bf16.msra.mxu0 0
    %453 = vmatprep.mubr.bf16.mxu0 0
    %454 = vmatmul.mubr.bf16.gmra.mrb[0].mxu0 %v419
    %v455 = vpop.f32.mrb[0].mxu0
    %v456 = vadd.f32 0.0, %v455
    %v457 = vpop.f32.mrb[0].mxu0
    %v458 = vpop.f32.mrb[0].mxu0
    %v459 = vpop.f32.mrb[0].mxu0
    %460 = vdwg.mxu0
    %v461 = vadd.f32 %v413, %v456
    %v462 = vmul.f32 %v461, 0.5
    %v463 = vsel %vm79, %v461, %v462
    %v464 = vtanh.pop %v463
    %v465 = vadd.f32 %v464, 1.0
    %v466 = vmul.f32 %v465, 0.5
    %v467 = vsel %vm79, %v464, %v466
    %v468 = vmul.f32 %v467, %v399
    %470 = vrot.lane.b32.xlu0 %v467, 64
    %v471 = vpop.permute.xlu0 %470
    %v473 = vmul.f32 %v467, %v471
    %475 = vrot.lane.b32.xlu0 %v473, 32
    %v476 = vpop.permute.xlu0 %475
    %v478 = vadd.f32 %v468, %v476
    %v479 = vtanh.pop %v478
    %481 = vrot.lane.b32.xlu0 %v479, 64
    %v482 = vpop.permute.xlu0 %481
    %v484 = vmul.f32 %v467, %v482
    %486 = vrot.lane.b32.xlu0 %v484, 32
    %v487 = vpop.permute.xlu0 %486
    %s489 = scalar_lea.vmem [#allocation2], 8
    %490 = vst.msk [vmem:[%s489] sm:$0x3] %vm173, %v487
    %s491 = scalar_lea.vmem [#allocation4], 10
    %v492 = vld [vmem:[%s491] sm:$0x3]
    %v493 = vpack.c.bf16 %v484, %v484
    %495 = vrot.lane.b32.xlu0 %v493, 32
    %v496 = vpop.permute.xlu0 %495
    %v498 = vsel %vm97, %v496, 0
    %500 = vmatprep.subr.bf16.mxu0 0
    %501 = vmatpush1.bf16.msra.mxu0 %v93
    %502 = vmatprep.subr.bf16.mxu0 0
    %503 = vmatpush1.bf16.msra.mxu0 %v94
    %504 = vmatprep.subr.bf16.mxu0 0
    %505 = vmatpush1.bf16.msra.mxu0 0
    %506 = vmatprep.subr.bf16.mxu0 0
    %507 = vmatpush1.bf16.msra.mxu0 0
    %508 = vmatprep.subr.bf16.mxu0 0
    %509 = vmatpush1.bf16.msra.mxu0 0
    %510 = vmatprep.subr.bf16.mxu0 0
    %511 = vmatpush1.bf16.msra.mxu0 0
    %512 = vmatprep.subr.bf16.mxu0 0
    %513 = vmatpush1.bf16.msra.mxu0 0
    %514 = vmatprep.subr.bf16.mxu0 0
    %515 = vmatpush1.bf16.msra.mxu0 0
    %516 = vmatprep.subr.bf16.mxu0 0
    %517 = vmatpush1.bf16.msra.mxu0 0
    %518 = vmatprep.subr.bf16.mxu0 0
    %519 = vmatpush1.bf16.msra.mxu0 0
    %520 = vmatprep.subr.bf16.mxu0 0
    %521 = vmatpush1.bf16.msra.mxu0 0
    %522 = vmatprep.subr.bf16.mxu0 0
    %523 = vmatpush1.bf16.msra.mxu0 0
    %524 = vmatprep.subr.bf16.mxu0 0
    %525 = vmatpush1.bf16.msra.mxu0 0
    %526 = vmatprep.subr.bf16.mxu0 0
    %527 = vmatpush1.bf16.msra.mxu0 0
    %528 = vmatprep.subr.bf16.mxu0 0
    %529 = vmatpush1.bf16.msra.mxu0 0
    %530 = vmatprep.subr.bf16.mxu0 0
    %531 = vmatpush1.bf16.msra.mxu0 0
    %532 = vmatprep.mubr.bf16.mxu0 0
    %533 = vmatmul.mubr.bf16.gmra.mrb[0].mxu0 %v498
    %v534 = vpop.f32.mrb[0].mxu0
    %v535 = vadd.f32 0.0, %v534
    %v536 = vpop.f32.mrb[0].mxu0
    %v537 = vpop.f32.mrb[0].mxu0
    %v538 = vpop.f32.mrb[0].mxu0
    %539 = vdwg.mxu0
    %v540 = vadd.f32 %v492, %v535
    %v541 = vmul.f32 %v540, 0.5
    %v542 = vsel %vm79, %v540, %v541
    %v543 = vtanh.pop %v542
    %v544 = vadd.f32 %v543, 1.0
    %v545 = vmul.f32 %v544, 0.5
    %v546 = vsel %vm79, %v543, %v545
    %v547 = vmul.f32 %v546, %v478
    %549 = vrot.lane.b32.xlu0 %v546, 64
    %v550 = vpop.permute.xlu0 %549
    %v552 = vmul.f32 %v546, %v550
    %554 = vrot.lane.b32.xlu0 %v552, 32
    %v555 = vpop.permute.xlu0 %554
    %v557 = vadd.f32 %v547, %v555
    %v558 = vtanh.pop %v557
    %560 = vrot.lane.b32.xlu0 %v558, 64
    %v561 = vpop.permute.xlu0 %560
    %v563 = vmul.f32 %v546, %v561
    %565 = vrot.lane.b32.xlu0 %v563, 32
    %v566 = vpop.permute.xlu0 %565
    %s568 = scalar_lea.vmem [#allocation2], 10
    %569 = vst.msk [vmem:[%s568] sm:$0x3] %vm173, %v566
    %s570 = scalar_lea.vmem [#allocation4], 12
    %v571 = vld [vmem:[%s570] sm:$0x3]
    %v572 = vpack.c.bf16 %v563, %v563
    %574 = vrot.lane.b32.xlu0 %v572, 32
    %v575 = vpop.permute.xlu0 %574
    %v577 = vsel %vm97, %v575, 0
    %579 = vmatprep.subr.bf16.mxu0 0
    %580 = vmatpush1.bf16.msra.mxu0 %v93
    %581 = vmatprep.subr.bf16.mxu0 0
    %582 = vmatpush1.bf16.msra.mxu0 %v94
    %583 = vmatprep.subr.bf16.mxu0 0
    %584 = vmatpush1.bf16.msra.mxu0 0
    %585 = vmatprep.subr.bf16.mxu0 0
    %586 = vmatpush1.bf16.msra.mxu0 0
    %587 = vmatprep.subr.bf16.mxu0 0
    %588 = vmatpush1.bf16.msra.mxu0 0
    %589 = vmatprep.subr.bf16.mxu0 0
    %590 = vmatpush1.bf16.msra.mxu0 0
    %591 = vmatprep.subr.bf16.mxu0 0
    %592 = vmatpush1.bf16.msra.mxu0 0
    %593 = vmatprep.subr.bf16.mxu0 0
    %594 = vmatpush1.bf16.msra.mxu0 0
    %595 = vmatprep.subr.bf16.mxu0 0
    %596 = vmatpush1.bf16.msra.mxu0 0
    %597 = vmatprep.subr.bf16.mxu0 0
    %598 = vmatpush1.bf16.msra.mxu0 0
    %599 = vmatprep.subr.bf16.mxu0 0
    %600 = vmatpush1.bf16.msra.mxu0 0
    %601 = vmatprep.subr.bf16.mxu0 0
    %602 = vmatpush1.bf16.msra.mxu0 0
    %603 = vmatprep.subr.bf16.mxu0 0
    %604 = vmatpush1.bf16.msra.mxu0 0
    %605 = vmatprep.subr.bf16.mxu0 0
    %606 = vmatpush1.bf16.msra.mxu0 0
    %607 = vmatprep.subr.bf16.mxu0 0
    %608 = vmatpush1.bf16.msra.mxu0 0
    %609 = vmatprep.subr.bf16.mxu0 0
    %610 = vmatpush1.bf16.msra.mxu0 0
    %611 = vmatprep.mubr.bf16.mxu0 0
    %612 = vmatmul.mubr.bf16.gmra.mrb[0].mxu0 %v577
    %v613 = vpop.f32.mrb[0].mxu0
    %v614 = vadd.f32 0.0, %v613
    %v615 = vpop.f32.mrb[0].mxu0
    %v616 = vpop.f32.mrb[0].mxu0
    %v617 = vpop.f32.mrb[0].mxu0
    %618 = vdwg.mxu0
    %v619 = vadd.f32 %v571, %v614
    %v620 = vmul.f32 %v619, 0.5
    %v621 = vsel %vm79, %v619, %v620
    %v622 = vtanh.pop %v621
    %v623 = vadd.f32 %v622, 1.0
    %v624 = vmul.f32 %v623, 0.5
    %v625 = vsel %vm79, %v622, %v624
    %v626 = vmul.f32 %v625, %v557
    %628 = vrot.lane.b32.xlu0 %v625, 64
    %v629 = vpop.permute.xlu0 %628
    %v631 = vmul.f32 %v625, %v629
    %633 = vrot.lane.b32.xlu0 %v631, 32
    %v634 = vpop.permute.xlu0 %633
    %v636 = vadd.f32 %v626, %v634
    %v637 = vtanh.pop %v636
    %639 = vrot.lane.b32.xlu0 %v637, 64
    %v640 = vpop.permute.xlu0 %639
    %v642 = vmul.f32 %v625, %v640
    %644 = vrot.lane.b32.xlu0 %v642, 32
    %v645 = vpop.permute.xlu0 %644
    %s647 = scalar_lea.vmem [#allocation2], 12
    %648 = vst.msk [vmem:[%s647] sm:$0x3] %vm173, %v645
    %s649 = scalar_lea.vmem [#allocation4], 14
    %v650 = vld [vmem:[%s649] sm:$0x3]
    %v651 = vpack.c.bf16 %v642, %v642
    %653 = vrot.lane.b32.xlu0 %v651, 32
    %v654 = vpop.permute.xlu0 %653
    %v656 = vsel %vm97, %v654, 0
    %658 = vmatprep.subr.bf16.mxu0 0
    %659 = vmatpush1.bf16.msra.mxu0 %v93
    %660 = vmatprep.subr.bf16.mxu0 0
    %661 = vmatpush1.bf16.msra.mxu0 %v94
    %662 = vmatprep.subr.bf16.mxu0 0
    %663 = vmatpush1.bf16.msra.mxu0 0
    %664 = vmatprep.subr.bf16.mxu0 0
    %665 = vmatpush1.bf16.msra.mxu0 0
    %666 = vmatprep.subr.bf16.mxu0 0
    %667 = vmatpush1.bf16.msra.mxu0 0
    %668 = vmatprep.subr.bf16.mxu0 0
    %669 = vmatpush1.bf16.msra.mxu0 0
    %670 = vmatprep.subr.bf16.mxu0 0
    %671 = vmatpush1.bf16.msra.mxu0 0
    %672 = vmatprep.subr.bf16.mxu0 0
    %673 = vmatpush1.bf16.msra.mxu0 0
    %674 = vmatprep.subr.bf16.mxu0 0
    %675 = vmatpush1.bf16.msra.mxu0 0
    %676 = vmatprep.subr.bf16.mxu0 0
    %677 = vmatpush1.bf16.msra.mxu0 0
    %678 = vmatprep.subr.bf16.mxu0 0
    %679 = vmatpush1.bf16.msra.mxu0 0
    %680 = vmatprep.subr.bf16.mxu0 0
    %681 = vmatpush1.bf16.msra.mxu0 0
    %682 = vmatprep.subr.bf16.mxu0 0
    %683 = vmatpush1.bf16.msra.mxu0 0
    %684 = vmatprep.subr.bf16.mxu0 0
    %685 = vmatpush1.bf16.msra.mxu0 0
    %686 = vmatprep.subr.bf16.mxu0 0
    %687 = vmatpush1.bf16.msra.mxu0 0
    %688 = vmatprep.subr.bf16.mxu0 0
    %689 = vmatpush1.bf16.msra.mxu0 0
    %690 = vmatprep.mubr.bf16.mxu0 0
    %691 = vmatmul.mubr.bf16.gmra.mrb[0].mxu0 %v656
    %v692 = vpop.f32.mrb[0].mxu0
    %v693 = vadd.f32 0.0, %v692
    %v694 = vpop.f32.mrb[0].mxu0
    %v695 = vpop.f32.mrb[0].mxu0
    %v696 = vpop.f32.mrb[0].mxu0
    %697 = vdwg.mxu0
    %v698 = vadd.f32 %v650, %v693
    %v699 = vmul.f32 %v698, 0.5
    %v700 = vsel %vm79, %v698, %v699
    %v701 = vtanh.pop %v700
    %v702 = vadd.f32 %v701, 1.0
    %v703 = vmul.f32 %v702, 0.5
    %v704 = vsel %vm79, %v701, %v703
    %v705 = vmul.f32 %v704, %v636
    %707 = vrot.lane.b32.xlu0 %v704, 64
    %v708 = vpop.permute.xlu0 %707
    %v710 = vmul.f32 %v704, %v708
    %712 = vrot.lane.b32.xlu0 %v710, 32
    %v713 = vpop.permute.xlu0 %712
    %v715 = vadd.f32 %v705, %v713
    %v716 = vtanh.pop %v715
    %718 = vrot.lane.b32.xlu0 %v716, 64
    %v719 = vpop.permute.xlu0 %718
    %v721 = vmul.f32 %v704, %v719
    %723 = vrot.lane.b32.xlu0 %v721, 32
    %v724 = vpop.permute.xlu0 %723
    %s726 = scalar_lea.vmem [#allocation2], 14
    %727 = vst.msk [vmem:[%s726] sm:$0x3] %vm173, %v724
    %728 = vst.msk [vmem:[#allocation10] sm:$0x3] %vm173, %v724
    %730 = vrot.lane.b32.xlu0 %v715, 96
    %v731 = vpop.permute.xlu0 %730
    %733 = vst.msk [vmem:[#allocation11] sm:$0x3] %vm173, %v731
    %v734 = vld [vmem:[#allocation2] sm:$0x3]
    %v735 = vld [vmem:[#allocation2 + $0x2] sm:$0x3]
    %v736 = vld [vmem:[#allocation2 + $0x4] sm:$0x3]
    %v737 = vld [vmem:[#allocation2 + $0x6] sm:$0x3]
    %v738 = vld [vmem:[#allocation2 + $0x8] sm:$0x3]
    %v739 = vld [vmem:[#allocation2 + $0xa] sm:$0x3]
    %v740 = vld [vmem:[#allocation2 + $0xc] sm:$0x3]
    %v741 = vld [vmem:[#allocation2 + $0xe] sm:$0x3]
    %v742 = vld [vmem:[%s5] sm:$0x3]
    %v743 = vld [vmem:[%s5 + $0x2] sm:$0x3]
    %v744 = vld [vmem:[%s5 + $0x4] sm:$0x3]
    %v745 = vld [vmem:[%s5 + $0x6] sm:$0x3]
    %v746 = vld [vmem:[%s5 + $0x8] sm:$0x3]
    %v747 = vld [vmem:[%s5 + $0xa] sm:$0x3]
    %v748 = vld [vmem:[%s5 + $0xc] sm:$0x3]
    %v749 = vld [vmem:[%s5 + $0xe] sm:$0x3]
    %v750 = vmul.f32 %v734, %v742
    %v751 = vmul.f32 %v735, %v743
    %v752 = vmul.f32 %v736, %v744
    %v753 = vmul.f32 %v737, %v745
    %v754 = vmul.f32 %v738, %v746
    %v755 = vmul.f32 %v739, %v747
    %v756 = vmul.f32 %v740, %v748
    %v757 = vmul.f32 %v741, %v749
    %v758 = vld [vmem:[%s4] sm:$0x1]
    %v760 = vlaneseq
    %v761 = vshrl.u32 %v760, 7
    %v762 = vsub.s32 0, %v761
    %v763 = vrot.slane %v758, %v762
    %v765 = vmul.f32 %v750, %v763
    %v766 = vmul.f32 %v751, %v763
    %v767 = vmul.f32 %v752, %v763
    %v768 = vmul.f32 %v753, %v763
    %v769 = vmul.f32 %v754, %v763
    %v770 = vmul.f32 %v755, %v763
    %v771 = vmul.f32 %v756, %v763
    %v772 = vmul.f32 %v757, %v763
    %v773 = vsel %vm173, %v765, 0.0
    %774 = vadd.xlane.f32.xlu0 %v773
    %v775 = vpop.xlane.xlu0 %774
    %v776 = vsel %vm173, %v766, 0.0
    %777 = vadd.xlane.f32.xlu0 %v776
    %v778 = vpop.xlane.xlu0 %777
    %v779 = vsel %vm173, %v767, 0.0
    %780 = vadd.xlane.f32.xlu0 %v779
    %v781 = vpop.xlane.xlu0 %780
    %v782 = vsel %vm173, %v768, 0.0
    %783 = vadd.xlane.f32.xlu0 %v782
    %v784 = vpop.xlane.xlu0 %783
    %v785 = vsel %vm173, %v769, 0.0
    %786 = vadd.xlane.f32.xlu0 %v785
    %v787 = vpop.xlane.xlu0 %786
    %v788 = vsel %vm173, %v770, 0.0
    %789 = vadd.xlane.f32.xlu0 %v788
    %v790 = vpop.xlane.xlu0 %789
    %v791 = vsel %vm173, %v771, 0.0
    %792 = vadd.xlane.f32.xlu0 %v791
    %v793 = vpop.xlane.xlu0 %792
    %v794 = vsel %vm173, %v772, 0.0
    %795 = vadd.xlane.f32.xlu0 %v794
    %v796 = vpop.xlane.xlu0 %795
    %s797 = sld [smem:[#allocation3]]
    %v798 = vstv %s797
    %v799 = vadd.f32 %v775, %v798
    %v800 = vadd.f32 %v778, %v798
    %v801 = vadd.f32 %v781, %v798
    %v802 = vadd.f32 %v784, %v798
    %v803 = vadd.f32 %v787, %v798
    %v804 = vadd.f32 %v790, %v798
    %v805 = vadd.f32 %v793, %v798
    %v806 = vadd.f32 %v796, %v798
    %v815 = vlaneseq
    %v816 = vshrl.u32 %v815, 7
    %v817 = vsub.s32 %v76, %v816
    %v818 = vrot.slane %v799, %v817
    %v819 = vlaneseq
    %v820 = vshrl.u32 %v819, 7
    %v821 = vsub.s32 %v76, %v820
    %v822 = vrot.slane %v800, %v821
    %v823 = vlaneseq
    %v824 = vshrl.u32 %v823, 7
    %v825 = vsub.s32 %v76, %v824
    %v826 = vrot.slane %v801, %v825
    %v827 = vlaneseq
    %v828 = vshrl.u32 %v827, 7
    %v829 = vsub.s32 %v76, %v828
    %v830 = vrot.slane %v802, %v829
    %v831 = vlaneseq
    %v832 = vshrl.u32 %v831, 7
    %v833 = vsub.s32 %v76, %v832
    %v834 = vrot.slane %v803, %v833
    %v835 = vlaneseq
    %v836 = vshrl.u32 %v835, 7
    %v837 = vsub.s32 %v76, %v836
    %v838 = vrot.slane %v804, %v837
    %v839 = vlaneseq
    %v840 = vshrl.u32 %v839, 7
    %v841 = vsub.s32 %v76, %v840
    %v842 = vrot.slane %v805, %v841
    %v843 = vlaneseq
    %v844 = vshrl.u32 %v843, 7
    %v845 = vsub.s32 %v76, %v844
    %v846 = vrot.slane %v806, %v845
    %vm847 = vcmask 1041409
    %v848 = vsel %vm847, %v822, %v818
    %vm849 = vcmask 1042434
    %v850 = vsel %vm849, %v826, %v848
    %vm851 = vcmask 1043459
    %v852 = vsel %vm851, %v830, %v850
    %vm853 = vcmask 1044484
    %v854 = vsel %vm853, %v834, %v852
    %vm855 = vcmask 1045509
    %v856 = vsel %vm855, %v838, %v854
    %vm857 = vcmask 1046534
    %v858 = vsel %vm857, %v842, %v856
    %vm859 = vcmask 1047559
    %v860 = vsel %vm859, %v846, %v858
    %vm862 = vcmask 15360
    %863 = vst.msk [vmem:[%s6] sm:$0xff] %vm862, %v860
    // Predicated region
    $region38: #{tpu_custom_call.1} parent=1 // pred_check
      _
    $region39: #{tpu_custom_call.1} parent=1 // pred_check_branch
      %865 = sbr.rel (0) target = $region41
    $region40: #{tpu_custom_call.1} parent=1 // pred_region
      _
    $region41: #{tpu_custom_call.1} parent=1 // pred_fallthru
      _
    // Predicated region
    $region42: #{tpu_custom_call.1} parent=1 // pred_check
      _
    $region43: #{tpu_custom_call.1} parent=1 // pred_check_branch
      %867 = sbr.rel (0) target = $region45
    $region44: #{tpu_custom_call.1} parent=1 // pred_region
      %s869 = ssub.s32 32, 32
      %870 = vsyncadd [#allocation6], %s869
      %s872 = sshll.u32 [#allocation10], 4
      %s873 = int_to_ptr.vmem [resolvable:$true] %s872
      %875 = dma.vmem_to_hbm [thread:$0]  %s873, 32, %s7, [#allocation6]
    $region45: #{tpu_custom_call.1} parent=1 // pred_fallthru
      _
    // Predicated region
    $region46: #{tpu_custom_call.1} parent=1 // pred_check
      _
    $region47: #{tpu_custom_call.1} parent=1 // pred_check_branch
      %877 = sbr.rel (0) target = $region49
    $region48: #{tpu_custom_call.1} parent=1 // pred_region
      %s879 = ssub.s32 32, 32
      %880 = vsyncadd [#allocation12], %s879
      %s882 = sshll.u32 [#allocation11], 4
      %s883 = int_to_ptr.vmem [resolvable:$true] %s882
      %885 = dma.vmem_to_hbm [thread:$0]  %s883, 32, %s8, [#allocation12]
    $region49: #{tpu_custom_call.1} parent=1 // pred_fallthru
      _
    // Predicated region
    $region50: #{tpu_custom_call.1} parent=1 // pred_check
      _
    $region51: #{tpu_custom_call.1} parent=1 // pred_check_branch
      %887 = sbr.rel (0) target = $region53
    $region52: #{tpu_custom_call.1} parent=1 // pred_region
      _
    $region53: #{tpu_custom_call.1} parent=1 // pred_fallthru
      _
    // Predicated region
    $region54: #{tpu_custom_call.1} parent=1 // pred_check
      _
    $region55: #{tpu_custom_call.1} parent=1 // pred_check_branch
      %889 = sbr.rel (0) target = $region57
    $region56: #{tpu_custom_call.1} parent=1 // pred_region
      %890 = dma.done [#allocation6], 32
    $region57: #{tpu_custom_call.1} parent=1 // pred_fallthru
      _
    // Predicated region
    $region58: #{tpu_custom_call.1} parent=1 // pred_check
      _
    $region59: #{tpu_custom_call.1} parent=1 // pred_check_branch
      %892 = sbr.rel (0) target = $region61
    $region60: #{tpu_custom_call.1} parent=1 // pred_region
      %893 = dma.done [#allocation12], 32
    $region61: #{tpu_custom_call.1} parent=1 // pred_fallthru
      _
    %894 = vsyncpa [#allocation5], 1
    %895 = vsyncpa [#allocation8], 1
    %896 = vsyncpa [#allocation6], 1
    %897 = vsyncpa [#allocation12], 1

</llo_original>
